<compile_context>
chip_gen: v5e
topology: v5e:2x2
jax: 0.10.0
libtpu: 0.0.40
codegen_flags: <defaults>
</compile_context>

<pallas_src>
import math

import jax
import jax.numpy as jnp
from jax.experimental import pallas as pl
from jax.experimental.pallas import tpu as pltpu


def _pos_encoding_kernel(x_ref, pe_ref, o_ref):
    # (tb, L*D) + (1, L*D) broadcast add; pe is already in x's dtype.
    o_ref[...] = x_ref[...] + pe_ref[...]


def _make_pe_table(L, D, dtype):
    """Sinusoidal table identical to the PyTorch buffer (first L rows).

    pe[:, 0::2] = sin(pos * div_term), pe[:, 1::2] = cos(pos * div_term).
    D must be even (the PyTorch module also fails for odd n_filters).
    """
    position = jnp.arange(L, dtype=jnp.float32)[:, None]                  # (L, 1)
    div_term = jnp.exp(jnp.arange(0, D, 2, dtype=jnp.float32)
                       * (-math.log(10000.0) / D))                        # (D/2,)
    angles = position * div_term                                          # (L, D/2)
    pe = jnp.stack([jnp.sin(angles), jnp.cos(angles)], axis=-1)           # (L, D/2, 2)
    return pe.reshape(L, D).astype(dtype)


def position_encoding(x, *, n_filters=128, max_len=500,
                      target_block_bytes=4 * 1024 * 1024,
                      in_place=False):
    """x: (*, L, D) with D == n_filters and L <= max_len. Returns x + pe[:L]."""
    *lead, L, D = x.shape
    if D != n_filters:
        raise ValueError(f"last dim {D} != n_filters {n_filters}")
    if L > max_len:
        raise ValueError(f"sequence length {L} > max_len {max_len}")
    if n_filters % 2 != 0:
        raise ValueError("n_filters must be even (matches the PyTorch module)")

    B = 1
    for d in lead:
        B *= int(d)
    LD = L * D
    itemsize = jnp.dtype(x.dtype).itemsize

    x2 = x.reshape(B, LD)                                  # free row-major reshape
    pe = _make_pe_table(L, D, x.dtype).reshape(1, LD)      # added in x's dtype

    # ---- batch-tile sizing (cdiv-based, sublane-aligned) --------------------
    sub = max(8, 32 // itemsize)          # rows / vreg: 8 (f32), 16 (bf16), 32 (i8)
    row_bytes = LD * itemsize
    cap_rows = max(1, target_block_bytes // row_bytes)
    if cap_rows >= B:
        tb = B
        if B > sub:
            # Split into >=2 grid steps so both v7x TensorCores get work
            # (free on single-TC v5e/v6e).
            half = -(-B // 2)
            tb = min(B, -(-half // sub) * sub)
    else:
        tb = min(B, max(sub, (cap_rows // sub) * sub))
    num_blocks = pl.cdiv(B, tb)           # ragged last block is masked by Pallas

    # VMEM budget: double-buffered x + out blocks, plus the resident pe table.
    block_bytes = tb * row_bytes
    pe_bytes = LD * itemsize
    vmem_limit = int(min(4 * block_bytes + 2 * pe_bytes + (2 << 20), 64 << 20))

    cost = pl.CostEstimate(
        flops=B * LD,
        transcendentals=0,
        bytes_accessed=2 * B * LD * itemsize + pe_bytes)

    def _run(single_buffer_pe):
        if single_buffer_pe:
            # pe's block index never changes -> a single buffer suffices.
            pe_spec = pl.BlockSpec((1, LD), lambda i: (0, 0),
                                   pipeline_mode=pl.Buffered(1))
        else:
            pe_spec = pl.BlockSpec((1, LD), lambda i: (0, 0))
        return pl.pallas_call(
            _pos_encoding_kernel,
            out_shape=jax.ShapeDtypeStruct((B, LD), x.dtype),
            grid_spec=pltpu.PrefetchScalarGridSpec(
                num_scalar_prefetch=0,
                grid=(num_blocks,),
                in_specs=[
                    pl.BlockSpec((tb, LD), lambda i: (i, 0)),
                    pe_spec,
                ],
                out_specs=pl.BlockSpec((tb, LD), lambda i: (i, 0)),
            ),
            compiler_params=pltpu.CompilerParams(
                dimension_semantics=("parallel",),
                vmem_limit_bytes=vmem_limit),
            cost_estimate=cost,
            input_output_aliases=({0: 0} if in_place else {}),
        )(x2, pe)

    try:
        out = _run(True)
    except Exception:
        # pl.Buffered(1) unsupported on this jax/backend: fall back to the
        # default double-buffered pe spec (costs one extra L*D tile of VMEM).
        out = _run(False)
    return out.reshape(x.shape)


def _reference(x, *, n_filters, max_len):
    """Pure-JAX mirror of the PyTorch forward (pe added in x's dtype)."""
    L, D = x.shape[-2], x.shape[-1]
    assert D == n_filters and L <= max_len
    return x + _make_pe_table(L, D, x.dtype)


if __name__ == "__main__":
    tol = dict(rtol=1e-6, atol=1e-6)

    # (1) 4-D input, default module config (extra-leading-dims path).
    x1 = jax.random.normal(jax.random.PRNGKey(0), (2, 3, 8, 128), jnp.float32)
    o1 = jax.block_until_ready(position_encoding(x1))
    assert o1.shape == x1.shape
    assert jnp.allclose(o1, _reference(x1, n_filters=128, max_len=500), **tol)

    # (2) 3-D input, like the docstring example.
    x2 = jax.random.normal(jax.random.PRNGKey(1), (3, 16, 128), jnp.float32)
    o2 = jax.block_until_ready(position_encoding(x2))
    assert jnp.allclose(o2, _reference(x2, n_filters=128, max_len=500), **tol)

    # (3) Ragged cdiv grid: B=20 rows, tiny forced blocks -> 3 steps, masked tail.
    x3 = jax.random.normal(jax.random.PRNGKey(2), (4, 5, 12, 64), jnp.float32)
    o3 = jax.block_until_ready(
        position_encoding(x3, n_filters=64, max_len=100,
                          target_block_bytes=8 * 1024))
    assert jnp.allclose(o3, _reference(x3, n_filters=64, max_len=100), **tol)

    # (4) In-place aliased variant (donatable-x path).
    o4 = jax.block_until_ready(position_encoding(x2, in_place=True))
    assert jnp.allclose(o4, _reference(x2, n_filters=128, max_len=500), **tol)

    # (5) bf16 activations (add performed in bf16; see dtype note above).
    x5 = jax.random.normal(jax.random.PRNGKey(3), (4, 16, 128),
                           jnp.float32).astype(jnp.bfloat16)
    o5 = jax.block_until_ready(position_encoding(x5))
    assert jnp.allclose(o5.astype(jnp.float32),
                        _reference(x5, n_filters=128,
                                   max_len=500).astype(jnp.float32),
                        rtol=2e-2, atol=2e-2)

    print("KERNEL_OK")
</pallas_src>

<mosaic_0001>
module attributes {stable_mosaic.version = 11 : i64} {
  func.func @_pos_encoding_kernel(%arg0: i32, %arg1: memref<6x1024xf32, #tpu.memory_space<vmem>>, %arg2: memref<1x1024xf32, #tpu.memory_space<vmem>>, %arg3: memref<6x1024xf32, #tpu.memory_space<vmem>>) attributes {dimension_semantics = [#tpu.dimension_semantics<parallel>], iteration_bounds = array<i64: 1>, scalar_prefetch = 0 : i64, scratch_operands = 0 : i64, tpu.core_type = #tpu.core_type<tc>, window_params = [{transform_indices = @transform_0, window_bounds = array<i64: 6, 1024>}, {pipeline_mode = #tpu.pipeline_mode<synchronous>, transform_indices = @transform_1, window_bounds = array<i64: 1, 1024>}, {transform_indices = @transform_2, window_bounds = array<i64: 6, 1024>}]} {
    %c0 = arith.constant 0 : index
    %c0_0 = arith.constant 0 : index
    %0 = vector.load %arg1[%c0, %c0_0] : memref<6x1024xf32, #tpu.memory_space<vmem>>, vector<6x1024xf32>
    %c0_1 = arith.constant 0 : index
    %c0_2 = arith.constant 0 : index
    %1 = vector.load %arg2[%c0_1, %c0_2] : memref<1x1024xf32, #tpu.memory_space<vmem>>, vector<1x1024xf32>
    %2 = vector.broadcast %1 : vector<1x1024xf32> to vector<6x1024xf32>
    %3 = arith.addf %0, %2 : vector<6x1024xf32>
    %c0_3 = arith.constant 0 : index
    %c0_4 = arith.constant 0 : index
    %4 = vector.load %arg3[%c0_3, %c0_4] : memref<6x1024xf32, #tpu.memory_space<vmem>>, vector<6x1024xf32>
    tpu.vector_store %arg3[%c0_3, %c0_4], %3 {strides = array<i32>} : memref<6x1024xf32, #tpu.memory_space<vmem>>, vector<6x1024xf32>,
    return
  }
  func.func @transform_0(%arg0: i32) -> (i32, i32) {
    %c0_i32 = arith.constant 0 : i32
    %c0_i32_0 = arith.constant 0 : i32
    return %arg0, %c0_i32 : i32, i32
  }
  func.func @transform_1(%arg0: i32) -> (i32, i32) {
    %c0_i32 = arith.constant 0 : i32
    %c0_i32_0 = arith.constant 0 : i32
    %c0_i32_1 = arith.constant 0 : i32
    return %c0_i32, %c0_i32_0 : i32, i32
  }
  func.func @transform_2(%arg0: i32) -> (i32, i32) {
    %c0_i32 = arith.constant 0 : i32
    %c0_i32_0 = arith.constant 0 : i32
    return %arg0, %c0_i32 : i32, i32
  }
}

module attributes {stable_mosaic.version = 11 : i64} {
  func.func @_pos_encoding_kernel(%arg0: i32, %arg1: memref<6x1024xf32, #tpu.memory_space<vmem>>, %arg2: memref<1x1024xf32, #tpu.memory_space<vmem>>, %arg3: memref<6x1024xf32, #tpu.memory_space<vmem>>) attributes {dimension_semantics = [#tpu.dimension_semantics<parallel>], iteration_bounds = array<i64: 1>, scalar_prefetch = 0 : i64, scratch_operands = 0 : i64, tpu.core_type = #tpu.core_type<tc>, window_params = [{transform_indices = @transform_0, window_bounds = array<i64: 6, 1024>}, {pipeline_mode = #tpu.pipeline_mode<synchronous>, transform_indices = @transform_1, window_bounds = array<i64: 1, 1024>}, {transform_indices = @transform_2, window_bounds = array<i64: 6, 1024>}]} {
    %c0 = arith.constant 0 : index
    %c0_0 = arith.constant 0 : index
    %0 = vector.load %arg1[%c0, %c0_0] : memref<6x1024xf32, #tpu.memory_space<vmem>>, vector<6x1024xf32>
    %c0_1 = arith.constant 0 : index
    %c0_2 = arith.constant 0 : index
    %1 = vector.load %arg2[%c0_1, %c0_2] : memref<1x1024xf32, #tpu.memory_space<vmem>>, vector<1x1024xf32>
    %2 = vector.broadcast %1 : vector<1x1024xf32> to vector<6x1024xf32>
    %3 = arith.addf %0, %2 : vector<6x1024xf32>
    %c0_3 = arith.constant 0 : index
    %c0_4 = arith.constant 0 : index
    %4 = vector.load %arg3[%c0_3, %c0_4] : memref<6x1024xf32, #tpu.memory_space<vmem>>, vector<6x1024xf32>
    tpu.vector_store %arg3[%c0_3, %c0_4], %3 {strides = array<i32>} : memref<6x1024xf32, #tpu.memory_space<vmem>>, vector<6x1024xf32>,
    return
  }
  func.func @transform_0(%arg0: i32) -> (i32, i32) {
    %c0_i32 = arith.constant 0 : i32
    %c0_i32_0 = arith.constant 0 : i32
    return %arg0, %c0_i32 : i32, i32
  }
  func.func @transform_1(%arg0: i32) -> (i32, i32) {
    %c0_i32 = arith.constant 0 : i32
    %c0_i32_0 = arith.constant 0 : i32
    %c0_i32_1 = arith.constant 0 : i32
    return %c0_i32, %c0_i32_0 : i32, i32
  }
  func.func @transform_2(%arg0: i32) -> (i32, i32) {
    %c0_i32 = arith.constant 0 : i32
    %c0_i32_0 = arith.constant 0 : i32
    return %arg0, %c0_i32 : i32, i32
  }
}

</mosaic_0001>

<llo_original>
// kernel: tpu_custom_call.1
$region0: #{tpu_custom_call.1}
  #allocation0 [shape = 'u32[]', space=smem, size = 0x4, offset = 0x4, fixed_abs, tag = 'smem constant byte address 0x4 - core index']
  #allocation1 [shape = 'u32[72,128]{1,0:T(1,128)}', space=vmem, size = 0x9000, scoped, tag = 'internal scratch']
  %s0 = inlined_call_operand.hbm [shape: f32[6,1024], index: 0, kind: input, shape index: {}]
  %s1 = inlined_call_operand.hbm [shape: f32[1,1024], index: 1, kind: input, shape index: {}]
  %s2 = inlined_call_operand.hbm [shape: f32[6,1024], index: 2, kind: output, shape index: {}]
  %s3 = sld [smem:[#allocation0]]
  $region26: #{tpu_custom_call.1} parent=0
    _
  %s5 = ssub.s32 1, %s3
  %s6 = scalar_select 0, %s5, %s3
  $region1: #{tpu_custom_call.1} parent=0
    #allocation2 [shape = 'u8[32768]{0}', space=vmem, size = 0x8000, scoped, tag = 'input window, operand 0, single buffered']
    #allocation3 [shape = 's32[1]{0}', space=sflag, size = 0x4, scoped, tag = 'scoped memory for tpu_custom_call.1']
    #allocation4 [shape = 's32[1]{0}', space=sflag, size = 0x4, scoped, tag = 'scoped memory for tpu_custom_call.1']
    #allocation5 [shape = 'u8[4096]{0}', space=vmem, size = 0x1000, scoped, tag = 'input window, operand 1, single buffered']
    #allocation6 [shape = 's32[1]{0}', space=sflag, size = 0x4, scoped, tag = 'scoped memory for tpu_custom_call.1']
    #allocation7 [shape = 'u8[32768]{0}', space=vmem, size = 0x8000, scoped, tag = 'output window, operand 0, single buffered']
    %7 = vsyncpa [#allocation3], 0
    %8 = vsyncpa [#allocation6], 0
    %9 = vsyncpa [#allocation4], 0
    // Predicated region
    $region2: #{tpu_custom_call.1} parent=1 // pred_check
      _
    $region3: #{tpu_custom_call.1} parent=1 // pred_check_branch
      %11 = sbr.rel (0) target = $region5
    $region4: #{tpu_custom_call.1} parent=1 // pred_region
      %13 = vsyncadd [#allocation3], 0
      %s15 = sshll.u32 %s0, 4
      %s16 = int_to_ptr.hbm [resolvable:$true] %s15
      %s17 = sshll.u32 [#allocation2], 4
      %s18 = int_to_ptr.vmem [resolvable:$true] %s17
      %20 = dma.hbm_to_vmem [thread:$0]  %s16, 1024, %s18, [#allocation3]
    $region5: #{tpu_custom_call.1} parent=1 // pred_fallthru
      _
    // Predicated region
    $region6: #{tpu_custom_call.1} parent=1 // pred_check
      _
    $region7: #{tpu_custom_call.1} parent=1 // pred_check_branch
      %22 = sbr.rel (0) target = $region9
    $region8: #{tpu_custom_call.1} parent=1 // pred_region
      %24 = vsyncadd [#allocation6], 0
      %s26 = sshll.u32 %s1, 4
      %s27 = int_to_ptr.hbm [resolvable:$true] %s26
      %s28 = sshll.u32 [#allocation5], 4
      %s29 = int_to_ptr.vmem [resolvable:$true] %s28
      %31 = dma.hbm_to_vmem [thread:$0]  %s27, 128, %s29, [#allocation6]
    $region9: #{tpu_custom_call.1} parent=1 // pred_fallthru
      _
    // Predicated region
    $region10: #{tpu_custom_call.1} parent=1 // pred_check
      _
    $region11: #{tpu_custom_call.1} parent=1 // pred_check_branch
      %33 = sbr.rel (0) target = $region13
    $region12: #{tpu_custom_call.1} parent=1 // pred_region
      %35 = dma.done [#allocation3], 1024
    $region13: #{tpu_custom_call.1} parent=1 // pred_fallthru
      _
    // Predicated region
    $region14: #{tpu_custom_call.1} parent=1 // pred_check
      _
    $region15: #{tpu_custom_call.1} parent=1 // pred_check_branch
      %37 = sbr.rel (0) target = $region17
    $region16: #{tpu_custom_call.1} parent=1 // pred_region
      %39 = dma.done [#allocation6], 128
    $region17: #{tpu_custom_call.1} parent=1 // pred_fallthru
      _
    %v40 = vld [vmem:[#allocation2] sm:$0x3f]
    %v41 = vld [vmem:[#allocation2 + $0x8] sm:$0x3f]
    %v42 = vld [vmem:[#allocation2 + $0x10] sm:$0x3f]
    %v43 = vld [vmem:[#allocation2 + $0x18] sm:$0x3f]
    %v44 = vld [vmem:[#allocation2 + $0x20] sm:$0x3f]
    %v45 = vld [vmem:[#allocation2 + $0x28] sm:$0x3f]
    %v46 = vld [vmem:[#allocation2 + $0x30] sm:$0x3f]
    %v47 = vld [vmem:[#allocation2 + $0x38] sm:$0x3f]
    %v48 = vld [vmem:[#allocation5] sm:$0xff]
    %v50 = vperm.slane %v48, 0
    %v51 = vperm.slane %v48, 1
    %v52 = vperm.slane %v48, 2
    %v53 = vperm.slane %v48, 3
    %v54 = vperm.slane %v48, 4
    %v55 = vperm.slane %v48, 5
    %v56 = vperm.slane %v48, 6
    %v57 = vperm.slane %v48, 7
    %v66 = vadd.f32 %v40, %v50
    %v67 = vadd.f32 %v41, %v51
    %v68 = vadd.f32 %v42, %v52
    %v69 = vadd.f32 %v43, %v53
    %v70 = vadd.f32 %v44, %v54
    %v71 = vadd.f32 %v45, %v55
    %v72 = vadd.f32 %v46, %v56
    %v73 = vadd.f32 %v47, %v57
    %74 = vst [vmem:[#allocation7] sm:$0x3f] %v66
    %75 = vst [vmem:[#allocation7 + $0x8] sm:$0x3f] %v67
    %76 = vst [vmem:[#allocation7 + $0x10] sm:$0x3f] %v68
    %77 = vst [vmem:[#allocation7 + $0x18] sm:$0x3f] %v69
    %78 = vst [vmem:[#allocation7 + $0x20] sm:$0x3f] %v70
    %79 = vst [vmem:[#allocation7 + $0x28] sm:$0x3f] %v71
    %80 = vst [vmem:[#allocation7 + $0x30] sm:$0x3f] %v72
    %81 = vst [vmem:[#allocation7 + $0x38] sm:$0x3f] %v73
    // Predicated region
    $region18: #{tpu_custom_call.1} parent=1 // pred_check
      _
    $region19: #{tpu_custom_call.1} parent=1 // pred_check_branch
      %83 = sbr.rel (0) target = $region21
    $region20: #{tpu_custom_call.1} parent=1 // pred_region
      %85 = vsyncadd [#allocation4], 0
      %s87 = sshll.u32 [#allocation7], 4
      %s88 = int_to_ptr.vmem [resolvable:$true] %s87
      %s89 = sshll.u32 %s2, 4
      %s90 = int_to_ptr.hbm [resolvable:$true] %s89
      %92 = dma.vmem_to_hbm [thread:$0]  %s88, 1024, %s90, [#allocation4]
    $region21: #{tpu_custom_call.1} parent=1 // pred_fallthru
      _
    // Predicated region
    $region22: #{tpu_custom_call.1} parent=1 // pred_check
      _
    $region23: #{tpu_custom_call.1} parent=1 // pred_check_branch
      %94 = sbr.rel (0) target = $region25
    $region24: #{tpu_custom_call.1} parent=1 // pred_region
      %96 = dma.done [#allocation4], 1024
    $region25: #{tpu_custom_call.1} parent=1 // pred_fallthru
      _
    %97 = vsyncpa [#allocation3], 1
    %98 = vsyncpa [#allocation6], 1
    %99 = vsyncpa [#allocation4], 1

// kernel: tpu_custom_call.1
$region0: #{tpu_custom_call.1}
  #allocation0 [shape = 'u32[]', space=smem, size = 0x4, offset = 0x4, fixed_abs, tag = 'smem constant byte address 0x4 - core index']
  #allocation1 [shape = 'u32[72,128]{1,0:T(1,128)}', space=vmem, size = 0x9000, scoped, tag = 'internal scratch']
  %s0 = inlined_call_operand.hbm [shape: f32[6,1024], index: 0, kind: input, shape index: {}]
  %s1 = inlined_call_operand.hbm [shape: f32[1,1024], index: 1, kind: input, shape index: {}]
  %s2 = inlined_call_operand.hbm [shape: f32[6,1024], index: 2, kind: output, shape index: {}]
  %s3 = sld [smem:[#allocation0]]
  $region26: #{tpu_custom_call.1} parent=0
    _
  %s5 = ssub.s32 1, %s3
  %s6 = scalar_select 0, %s5, %s3
  $region1: #{tpu_custom_call.1} parent=0
    #allocation2 [shape = 'u8[32768]{0}', space=vmem, size = 0x8000, scoped, tag = 'input window, operand 0, single buffered']
    #allocation3 [shape = 's32[1]{0}', space=sflag, size = 0x4, scoped, tag = 'scoped memory for tpu_custom_call.1']
    #allocation4 [shape = 's32[1]{0}', space=sflag, size = 0x4, scoped, tag = 'scoped memory for tpu_custom_call.1']
    #allocation5 [shape = 'u8[4096]{0}', space=vmem, size = 0x1000, scoped, tag = 'input window, operand 1, single buffered']
    #allocation6 [shape = 's32[1]{0}', space=sflag, size = 0x4, scoped, tag = 'scoped memory for tpu_custom_call.1']
    #allocation7 [shape = 'u8[32768]{0}', space=vmem, size = 0x8000, scoped, tag = 'output window, operand 0, single buffered']
    %7 = vsyncpa [#allocation3], 0
    %8 = vsyncpa [#allocation6], 0
    %9 = vsyncpa [#allocation4], 0
    // Predicated region
    $region2: #{tpu_custom_call.1} parent=1 // pred_check
      _
    $region3: #{tpu_custom_call.1} parent=1 // pred_check_branch
      %11 = sbr.rel (0) target = $region5
    $region4: #{tpu_custom_call.1} parent=1 // pred_region
      %13 = vsyncadd [#allocation3], 0
      %s15 = sshll.u32 %s0, 4
      %s16 = int_to_ptr.hbm [resolvable:$true] %s15
      %s17 = sshll.u32 [#allocation2], 4
      %s18 = int_to_ptr.vmem [resolvable:$true] %s17
      %20 = dma.hbm_to_vmem [thread:$0]  %s16, 1024, %s18, [#allocation3]
    $region5: #{tpu_custom_call.1} parent=1 // pred_fallthru
      _
    // Predicated region
    $region6: #{tpu_custom_call.1} parent=1 // pred_check
      _
    $region7: #{tpu_custom_call.1} parent=1 // pred_check_branch
      %22 = sbr.rel (0) target = $region9
    $region8: #{tpu_custom_call.1} parent=1 // pred_region
      %24 = vsyncadd [#allocation6], 0
      %s26 = sshll.u32 %s1, 4
      %s27 = int_to_ptr.hbm [resolvable:$true] %s26
      %s28 = sshll.u32 [#allocation5], 4
      %s29 = int_to_ptr.vmem [resolvable:$true] %s28
      %31 = dma.hbm_to_vmem [thread:$0]  %s27, 128, %s29, [#allocation6]
    $region9: #{tpu_custom_call.1} parent=1 // pred_fallthru
      _
    // Predicated region
    $region10: #{tpu_custom_call.1} parent=1 // pred_check
      _
    $region11: #{tpu_custom_call.1} parent=1 // pred_check_branch
      %33 = sbr.rel (0) target = $region13
    $region12: #{tpu_custom_call.1} parent=1 // pred_region
      %35 = dma.done [#allocation3], 1024
    $region13: #{tpu_custom_call.1} parent=1 // pred_fallthru
      _
    // Predicated region
    $region14: #{tpu_custom_call.1} parent=1 // pred_check
      _
    $region15: #{tpu_custom_call.1} parent=1 // pred_check_branch
      %37 = sbr.rel (0) target = $region17
    $region16: #{tpu_custom_call.1} parent=1 // pred_region
      %39 = dma.done [#allocation6], 128
    $region17: #{tpu_custom_call.1} parent=1 // pred_fallthru
      _
    %v40 = vld [vmem:[#allocation2] sm:$0x3f]
    %v41 = vld [vmem:[#allocation2 + $0x8] sm:$0x3f]
    %v42 = vld [vmem:[#allocation2 + $0x10] sm:$0x3f]
    %v43 = vld [vmem:[#allocation2 + $0x18] sm:$0x3f]
    %v44 = vld [vmem:[#allocation2 + $0x20] sm:$0x3f]
    %v45 = vld [vmem:[#allocation2 + $0x28] sm:$0x3f]
    %v46 = vld [vmem:[#allocation2 + $0x30] sm:$0x3f]
    %v47 = vld [vmem:[#allocation2 + $0x38] sm:$0x3f]
    %v48 = vld [vmem:[#allocation5] sm:$0xff]
    %v50 = vperm.slane %v48, 0
    %v51 = vperm.slane %v48, 1
    %v52 = vperm.slane %v48, 2
    %v53 = vperm.slane %v48, 3
    %v54 = vperm.slane %v48, 4
    %v55 = vperm.slane %v48, 5
    %v56 = vperm.slane %v48, 6
    %v57 = vperm.slane %v48, 7
    %v66 = vadd.f32 %v40, %v50
    %v67 = vadd.f32 %v41, %v51
    %v68 = vadd.f32 %v42, %v52
    %v69 = vadd.f32 %v43, %v53
    %v70 = vadd.f32 %v44, %v54
    %v71 = vadd.f32 %v45, %v55
    %v72 = vadd.f32 %v46, %v56
    %v73 = vadd.f32 %v47, %v57
    %74 = vst [vmem:[#allocation7] sm:$0x3f] %v66
    %75 = vst [vmem:[#allocation7 + $0x8] sm:$0x3f] %v67
    %76 = vst [vmem:[#allocation7 + $0x10] sm:$0x3f] %v68
    %77 = vst [vmem:[#allocation7 + $0x18] sm:$0x3f] %v69
    %78 = vst [vmem:[#allocation7 + $0x20] sm:$0x3f] %v70
    %79 = vst [vmem:[#allocation7 + $0x28] sm:$0x3f] %v71
    %80 = vst [vmem:[#allocation7 + $0x30] sm:$0x3f] %v72
    %81 = vst [vmem:[#allocation7 + $0x38] sm:$0x3f] %v73
    // Predicated region
    $region18: #{tpu_custom_call.1} parent=1 // pred_check
      _
    $region19: #{tpu_custom_call.1} parent=1 // pred_check_branch
      %83 = sbr.rel (0) target = $region21
    $region20: #{tpu_custom_call.1} parent=1 // pred_region
      %85 = vsyncadd [#allocation4], 0
      %s87 = sshll.u32 [#allocation7], 4
      %s88 = int_to_ptr.vmem [resolvable:$true] %s87
      %s89 = sshll.u32 %s2, 4
      %s90 = int_to_ptr.hbm [resolvable:$true] %s89
      %92 = dma.vmem_to_hbm [thread:$0]  %s88, 1024, %s90, [#allocation4]
    $region21: #{tpu_custom_call.1} parent=1 // pred_fallthru
      _
    // Predicated region
    $region22: #{tpu_custom_call.1} parent=1 // pred_check
      _
    $region23: #{tpu_custom_call.1} parent=1 // pred_check_branch
      %94 = sbr.rel (0) target = $region25
    $region24: #{tpu_custom_call.1} parent=1 // pred_region
      %96 = dma.done [#allocation4], 1024
    $region25: #{tpu_custom_call.1} parent=1 // pred_fallthru
      _
    %97 = vsyncpa [#allocation3], 1
    %98 = vsyncpa [#allocation6], 1
    %99 = vsyncpa [#allocation4], 1

</llo_original>
